<compile_context>
chip_gen: v5e
topology: v5e:2x2
jax: 0.10.0
libtpu: 0.0.40
codegen_flags: <defaults>
</compile_context>

<pallas_src>
import math

import jax
import jax.numpy as jnp
from jax import lax
from jax.experimental import pallas as pl
from jax.experimental.pallas import tpu as pltpu

_LANE = 128                   # hidden / gate / class dims padded to this lane width
_UNROLL_MAX = 8               # fully unroll in-kernel time loops up to this length
_LOOP_UNROLL = 4              # partial unroll for lax.fori_loop time loops
_BATCH_BLOCK_TARGET = 256     # preferred batch-tile rows (fills v6e/v7x 256x256 MXU)
_GI_BLOCK_BUDGET = 6 << 20    # per-buffer VMEM budget for one gi batch tile (bytes)
_VMEM_LIMIT = 64 * 1024 * 1024


def _round_up(x, m):
    return ((x + m - 1) // m) * m


def _pick_batch_block(n, bytes_per_row):
    """Batch-tile rows: <= target, fits the gi VMEM budget, multiple of 8
    (or the full batch when it is small).  Grids use cdiv; ragged tail blocks
    are handled by Pallas's masked boundary loads/stores (rows are
    independent, so garbage in padded rows never leaks into valid rows)."""
    if n <= 8:
        return n
    rows_fit = max(8, _GI_BLOCK_BUDGET // max(bytes_per_row, 1))
    blk = min(n, _BATCH_BLOCK_TARGET, rows_fit)
    return max(8, (blk // 8) * 8)


# ============================================================================
# Kernel 1: batched linear projection  o = bf16(x) @ w_bf16 + b_f32 (f32 acc)
# Used for (a) the hoisted GRU input projections over ALL timesteps at once
# and (b) the fc head.  Output lane width is always a multiple of 128.
# Output dtype is bf16 for activations consumed once per step (gi), f32 for
# the logits.
# ============================================================================
def _proj_kernel(x_ref, w_ref, b_ref, o_ref):
    xb = x_ref[...].astype(jnp.bfloat16)           # no-op when x already bf16
    acc = jnp.dot(xb, w_ref[...], preferred_element_type=jnp.float32) + b_ref[...]
    o_ref[...] = acc.astype(o_ref.dtype)


def linear_pallas(x, w_bf16, b_f32, *, out_dtype=jnp.bfloat16, block_rows=512):
    N, D = x.shape
    G = w_bf16.shape[1]
    if N <= block_rows:
        block_rows = N                              # full array = single block
    else:
        block_rows = max(8, (block_rows // 8) * 8)
    grid = pl.cdiv(N, block_rows)                   # ragged tail block is masked
    return pl.pallas_call(
        _proj_kernel,
        out_shape=jax.ShapeDtypeStruct((N, G), out_dtype),
        grid_spec=pltpu.PrefetchScalarGridSpec(
            num_scalar_prefetch=0,
            grid=(grid,),
            in_specs=[
                pl.BlockSpec((block_rows, D), lambda i: (i, 0)),
                pl.BlockSpec((D, G), lambda i: (0, 0)),
                pl.BlockSpec((1, G), lambda i: (0, 0)),
            ],
            out_specs=pl.BlockSpec((block_rows, G), lambda i: (i, 0)),
        ),
        compiler_params=pltpu.CompilerParams(
            dimension_semantics=("parallel",),
            vmem_limit_bytes=_VMEM_LIMIT),
    )(x, w_bf16, b_f32)


# ============================================================================
# GRU cell math (f32 elementwise; gate slices are 128-lane aligned because the
# hidden size is padded to a multiple of 128).  PyTorch gate order: r, z, n.
# r/z recurrent biases are pre-folded into gi; only the n-gate b_hh remains
# (it is multiplied by r so it cannot be folded).
# ============================================================================
def _gru_cell(gi, gh, b_hh_n, h, Hp):
    r = jax.nn.sigmoid(gi[:, 0:Hp] + gh[:, 0:Hp])
    z = jax.nn.sigmoid(gi[:, Hp:2 * Hp] + gh[:, Hp:2 * Hp])
    n = jnp.tanh(gi[:, 2 * Hp:3 * Hp] + r * (gh[:, 2 * Hp:3 * Hp] + b_hh_n))
    return (1.0 - z) * n + z * h


def _gh(h, whh_ref):
    # recurrent projection: bf16 MXU operands, f32 accumulate, f32 carried h
    return jnp.dot(h.astype(jnp.bfloat16), whh_ref[...],
                   preferred_element_type=jnp.float32)


# ============================================================================
# Kernel 2: unidirectional GRU recurrence over a whole sequence for ONE batch
# tile per grid step (grid tiles the independent batch axis; weights resident
# in VMEM; gi slab double-buffered by the pipeline).
#   gi block : (T, Bb, 3*Hp) bf16   precomputed input projections
#   whh      : (Hp, 3*Hp)    bf16
#   b_hh_n   : (1, Hp)       f32    n-gate recurrent bias
#   last_only=True  -> output only the final hidden (Bb, Hp)
#   last_only=False -> output the full sequence (T, Bb, Hp)
# ============================================================================
def _make_uni_gru_kernel(T, Hp, last_only):
    def kernel(gi_ref, whh_ref, bhn_ref, o_ref):
        Bb = gi_ref.shape[1]
        bhn = jnp.broadcast_to(bhn_ref[...], (Bb, Hp))   # hoisted out of loop
        h0 = jnp.zeros((Bb, Hp), jnp.float32)

        def step(t, h):
            gi = gi_ref[t].astype(jnp.float32)
            h_new = _gru_cell(gi, _gh(h, whh_ref), bhn, h, Hp)
            if not last_only:
                o_ref[t] = h_new.astype(o_ref.dtype)
            return h_new

        if T <= _UNROLL_MAX:
            h = h0
            for t in range(T):
                h = step(t, h)
        else:
            h = lax.fori_loop(0, T, step, h0, unroll=_LOOP_UNROLL)

        if last_only:
            o_ref[...] = h.astype(o_ref.dtype)

    return kernel


def gru_uni(gi, w_hh, b_hh_n, Hp, *, last_only):
    T, Nb, G3 = gi.shape
    Bb = _pick_batch_block(Nb, T * G3 * gi.dtype.itemsize)
    grid = pl.cdiv(Nb, Bb)
    if last_only:
        out_shape = jax.ShapeDtypeStruct((Nb, Hp), jnp.bfloat16)
        out_spec = pl.BlockSpec((Bb, Hp), lambda i: (i, 0))
    else:
        out_shape = jax.ShapeDtypeStruct((T, Nb, Hp), jnp.bfloat16)
        out_spec = pl.BlockSpec((T, Bb, Hp), lambda i: (0, i, 0))
    return pl.pallas_call(
        _make_uni_gru_kernel(T, Hp, last_only),
        out_shape=out_shape,
        grid_spec=pltpu.PrefetchScalarGridSpec(
            num_scalar_prefetch=0,
            grid=(grid,),
            in_specs=[
                pl.BlockSpec((T, Bb, 3 * Hp), lambda i: (0, i, 0)),
                pl.BlockSpec((Hp, 3 * Hp), lambda i: (0, 0)),
                pl.BlockSpec((1, Hp), lambda i: (0, 0)),
            ],
            out_specs=out_spec,
        ),
        compiler_params=pltpu.CompilerParams(
            dimension_semantics=("parallel",),
            vmem_limit_bytes=_VMEM_LIMIT),
    )(gi, w_hh, b_hh_n)


# ============================================================================
# Kernel 3: fused bidirectional GRU layer, batch-tiled, with the forward and
# backward recurrences INTERLEAVED in one loop (step s handles fwd t=s and
# bwd t=T-1-s: two independent dependence chains per iteration).
#   gi block : (T, Bb, 6*Hp) bf16 -- fwd gates at lanes [0:3Hp], bwd [3Hp:6Hp]
#   sum_dirs=True  (last layer)  -> output rep = h_fwd + h_bwd : (T, Bb, Hp) f32
#   sum_dirs=False (inner layer) -> output [fwd | bwd] concat : (T, Bb, 2*Hp) bf16
# ============================================================================
def _make_bi_gru_kernel(T, Hp, sum_dirs):
    G = 3 * Hp

    def kernel(gi_ref, whf_ref, bhnf_ref, whb_ref, bhnb_ref, o_ref):
        Bb = gi_ref.shape[1]
        bhn_f = jnp.broadcast_to(bhnf_ref[...], (Bb, Hp))
        bhn_b = jnp.broadcast_to(bhnb_ref[...], (Bb, Hp))
        h0 = jnp.zeros((Bb, Hp), jnp.float32)

        if sum_dirs:
            # both directions accumulate into the output block (each position
            # is touched exactly once per direction over the whole loop)
            o_ref[...] = jnp.zeros_like(o_ref)

        def step(s, carry):
            h_f, h_b = carry
            tf = s
            tb = T - 1 - s
            gi_f = gi_ref[tf, :, 0:G].astype(jnp.float32)
            gi_b = gi_ref[tb, :, G:2 * G].astype(jnp.float32)
            h_f = _gru_cell(gi_f, _gh(h_f, whf_ref), bhn_f, h_f, Hp)
            h_b = _gru_cell(gi_b, _gh(h_b, whb_ref), bhn_b, h_b, Hp)
            if sum_dirs:
                o_ref[tf] = o_ref[tf] + h_f
                o_ref[tb] = o_ref[tb] + h_b
            else:
                o_ref[tf, :, 0:Hp] = h_f.astype(o_ref.dtype)
                o_ref[tb, :, Hp:2 * Hp] = h_b.astype(o_ref.dtype)
            return h_f, h_b

        if T <= _UNROLL_MAX:
            carry = (h0, h0)
            for s in range(T):
                carry = step(s, carry)
        else:
            lax.fori_loop(0, T, step, (h0, h0), unroll=_LOOP_UNROLL)

    return kernel


def gru_bidir(gi_both, w_hh_f, b_hh_n_f, w_hh_b, b_hh_n_b, Hp, *, sum_dirs):
    T, B, G6 = gi_both.shape
    Bb = _pick_batch_block(B, T * G6 * gi_both.dtype.itemsize)
    grid = pl.cdiv(B, Bb)
    if sum_dirs:
        out_shape = jax.ShapeDtypeStruct((T, B, Hp), jnp.float32)
        out_spec = pl.BlockSpec((T, Bb, Hp), lambda i: (0, i, 0))
    else:
        out_shape = jax.ShapeDtypeStruct((T, B, 2 * Hp), jnp.bfloat16)
        out_spec = pl.BlockSpec((T, Bb, 2 * Hp), lambda i: (0, i, 0))
    return pl.pallas_call(
        _make_bi_gru_kernel(T, Hp, sum_dirs),
        out_shape=out_shape,
        grid_spec=pltpu.PrefetchScalarGridSpec(
            num_scalar_prefetch=0,
            grid=(grid,),
            in_specs=[
                pl.BlockSpec((T, Bb, 6 * Hp), lambda i: (0, i, 0)),
                pl.BlockSpec((Hp, 3 * Hp), lambda i: (0, 0)),
                pl.BlockSpec((1, Hp), lambda i: (0, 0)),
                pl.BlockSpec((Hp, 3 * Hp), lambda i: (0, 0)),
                pl.BlockSpec((1, Hp), lambda i: (0, 0)),
            ],
            out_specs=out_spec,
        ),
        compiler_params=pltpu.CompilerParams(
            dimension_semantics=("parallel",),
            vmem_limit_bytes=_VMEM_LIMIT),
    )(gi_both, w_hh_f, b_hh_n_f, w_hh_b, b_hh_n_b)


# ============================================================================
# Weight packing: PyTorch-layout GRU weights -> lane-padded, gate-aligned,
# bf16 matrices.  Padded lanes are zero everywhere so padded lanes of h stay
# exactly 0 through the GRU cell (invariant relied on by the next layer).
# ============================================================================
def _pack_w_ih(w_ih, H_out, Hp_out, pad_in_to=None):
    """(3*H_out, D_in) W_ih -> (D_pad, 3*Hp_out); gate order r,z,n preserved,
    each gate in its own 128-aligned lane block."""
    _, D_in = w_ih.shape
    D_pad = D_in if pad_in_to is None else pad_in_to
    w = w_ih.reshape(3, H_out, D_in)
    out = jnp.zeros((3, Hp_out, D_pad), w_ih.dtype).at[:, :H_out, :D_in].set(w)
    return out.reshape(3 * Hp_out, D_pad).T


def _pack_w_ih_bidir_in(w_ih, Hs, Hsp):
    """(3*Hs, 2*Hs) W_ih of a stacked bidirectional layer -> (2*Hsp, 3*Hsp),
    matching the [fwd | bwd] lane layout produced by the previous layer."""
    w = w_ih.reshape(3, Hs, 2, Hs)
    out = jnp.zeros((3, Hsp, 2, Hsp), w_ih.dtype).at[:, :Hs, :, :Hs].set(w)
    return out.reshape(3 * Hsp, 2 * Hsp).T


def _pack_w_hh(w_hh, H, Hp):
    w = w_hh.reshape(3, H, H)
    out = jnp.zeros((3, Hp, Hp), w_hh.dtype).at[:, :H, :H].set(w)
    return out.reshape(3 * Hp, Hp).T


def _pack_bias_folded(b_ih, b_hh, H, Hp):
    """Fold the r/z portions of b_hh into b_ih (they are plain adds, so they
    can ride along with the hoisted input projection); return the folded
    (1, 3*Hp) input bias and the separate (1, Hp) n-gate recurrent bias."""
    bi = b_ih.reshape(3, H)
    bh = b_hh.reshape(3, H)
    fold = jnp.zeros((3, Hp), jnp.float32).at[:, :H].set(bi)
    fold = fold.at[0, :H].add(bh[0]).at[1, :H].add(bh[1])
    b_ih_packed = fold.reshape(1, 3 * Hp)
    b_hh_n = jnp.zeros((1, Hp), jnp.float32).at[0, :H].set(bh[2])
    return b_ih_packed, b_hh_n


def pack_params(params, n_classes, hidden_size, hidden_size_seq):
    He, Hs = hidden_size, hidden_size_seq
    Hep, Hsp = _round_up(He, _LANE), _round_up(Hs, _LANE)
    C1 = n_classes + 1
    Cp = _round_up(C1, _LANE)

    packed = {"He": He, "Hep": Hep, "Hs": Hs, "Hsp": Hsp, "C1": C1, "Cp": Cp,
              "embed": [], "seq": []}

    # embed (unidirectional) GRU layers
    for l, (w_ih, w_hh, b_ih, b_hh) in enumerate(params["embed_gru"]):
        pad_in = None if l == 0 else Hep      # layer l>0 consumes padded hidden
        b_ih_p, b_hh_n = _pack_bias_folded(b_ih, b_hh, He, Hep)
        packed["embed"].append(dict(
            w_ih=_pack_w_ih(w_ih, He, Hep, pad_in).astype(jnp.bfloat16),
            b_ih=b_ih_p,
            w_hh=_pack_w_hh(w_hh, He, Hep).astype(jnp.bfloat16),
            b_hh_n=b_hh_n,
        ))

    # sequence bidirectional GRU layers (fwd + bwd input projections fused)
    for l, (fwd, bwd) in enumerate(params["seq_gru"]):
        wih, bih, bhn = [], [], []
        for (w_ih, w_hh, b_ih, b_hh) in (fwd, bwd):
            if l == 0:
                wih.append(_pack_w_ih(w_ih, Hs, Hsp, pad_in_to=Hep))
            else:
                wih.append(_pack_w_ih_bidir_in(w_ih, Hs, Hsp))
            b_ih_p, b_hh_n = _pack_bias_folded(b_ih, b_hh, Hs, Hsp)
            bih.append(b_ih_p)
            bhn.append(b_hh_n)
        packed["seq"].append(dict(
            w_ih_both=jnp.concatenate(wih, axis=1).astype(jnp.bfloat16),
            b_ih_both=jnp.concatenate(bih, axis=1),
            w_hh_f=_pack_w_hh(fwd[1], Hs, Hsp).astype(jnp.bfloat16),
            b_hh_n_f=bhn[0],
            w_hh_b=_pack_w_hh(bwd[1], Hs, Hsp).astype(jnp.bfloat16),
            b_hh_n_b=bhn[1],
        ))

    # fc head, output padded to 128 lanes (sliced back to C1 in the wrapper)
    fc_w = jnp.zeros((Hsp, Cp), jnp.float32).at[:Hs, :C1].set(params["fc_w_t"])
    fc_b = jnp.zeros((1, Cp), jnp.float32).at[0, :C1].set(params["fc_b"])
    packed["fc_w"] = fc_w.astype(jnp.bfloat16)
    packed["fc_b"] = fc_b
    return packed


# ============================================================================
# Parameter init (deterministic, PyTorch-style uniform(-1/sqrt(H), 1/sqrt(H)))
# ============================================================================
def _u(key, shape, scale):
    return jax.random.uniform(key, shape, jnp.float32, -scale, scale)


def init_params(key, n_classes, input_size, hidden_size, n_layers,
                hidden_size_seq, n_layers_seq):
    params = {"embed_gru": [], "seq_gru": []}
    keys = iter(jax.random.split(key, 4 * (n_layers + 2 * n_layers_seq) + 2))

    s = 1.0 / math.sqrt(hidden_size)
    for l in range(n_layers):
        d_in = input_size if l == 0 else hidden_size
        params["embed_gru"].append((
            _u(next(keys), (3 * hidden_size, d_in), s),
            _u(next(keys), (3 * hidden_size, hidden_size), s),
            _u(next(keys), (3 * hidden_size,), s),
            _u(next(keys), (3 * hidden_size,), s),
        ))

    s2 = 1.0 / math.sqrt(hidden_size_seq)
    for l in range(n_layers_seq):
        d_in = hidden_size if l == 0 else 2 * hidden_size_seq
        layer = []
        for _direction in range(2):
            layer.append((
                _u(next(keys), (3 * hidden_size_seq, d_in), s2),
                _u(next(keys), (3 * hidden_size_seq, hidden_size_seq), s2),
                _u(next(keys), (3 * hidden_size_seq,), s2),
                _u(next(keys), (3 * hidden_size_seq,), s2),
            ))
        params["seq_gru"].append(tuple(layer))

    s3 = 1.0 / math.sqrt(hidden_size_seq)
    params["fc_w_t"] = _u(next(keys), (hidden_size_seq, n_classes + 1), s3)
    params["fc_b"] = _u(next(keys), (n_classes + 1,), s3)
    return params


# ============================================================================
# TAD forward (encoder_type='rnn')
# ============================================================================
def tad_forward(packed, x):
    """x: (B, T, n_frames, input_size) f32 -> (logit (B,T,C+1), rep (B,T,Hs))."""
    B, T, F, Din = x.shape
    Hep, Hsp = packed["Hep"], packed["Hsp"]
    Hs, C1 = packed["Hs"], packed["C1"]

    # ---- visual/frame encoder: GRU over frames, "batch" = B*T sequences ----
    Nb = B * T
    # TODO(synk): fold this frame-major relayout into the projection kernel's
    # index_map instead of an XLA transpose (x is ~3Hep/Din smaller than gi,
    # so this is a minor cost).
    cur = jnp.transpose(x, (2, 0, 1, 3)).reshape(F, Nb, Din)   # frame-major
    emb = None
    n_embed = len(packed["embed"])
    for l, lp in enumerate(packed["embed"]):
        d_in = cur.shape[-1]
        gi = linear_pallas(cur.reshape(F * Nb, d_in), lp["w_ih"], lp["b_ih"],
                           out_dtype=jnp.bfloat16)
        gi = gi.reshape(F, Nb, 3 * Hep)
        last = l == n_embed - 1
        out = gru_uni(gi, lp["w_hh"], lp["b_hh_n"], Hep, last_only=last)
        if last:
            emb = out                                          # (Nb, Hep) bf16
        else:
            cur = out                                          # (F, Nb, Hep) bf16

    # ---- sequence encoder: bidirectional GRU over timesteps ----
    cur = jnp.transpose(emb.reshape(B, T, Hep), (1, 0, 2))     # (T, B, Hep)
    rep_t = None
    n_seq = len(packed["seq"])
    for l, lp in enumerate(packed["seq"]):
        d_in = cur.shape[-1]
        gi = linear_pallas(cur.reshape(T * B, d_in),
                           lp["w_ih_both"], lp["b_ih_both"],
                           out_dtype=jnp.bfloat16)
        gi = gi.reshape(T, B, 6 * Hsp)
        last = l == n_seq - 1
        out = gru_bidir(gi, lp["w_hh_f"], lp["b_hh_n_f"],
                        lp["w_hh_b"], lp["b_hh_n_b"], Hsp, sum_dirs=last)
        if last:
            rep_t = out                                        # (T, B, Hsp) f32
        else:
            cur = out                                          # (T, B, 2*Hsp) bf16

    # ---- back to batch-major once; fc consumes the batch-major rep so the
    # logits come out already in (B, T, C) order (no second transpose) ----
    rep_bt = jnp.transpose(rep_t, (1, 0, 2))                   # (B, T, Hsp) f32
    logit2d = linear_pallas(rep_bt.reshape(B * T, Hsp),
                            packed["fc_w"], packed["fc_b"],
                            out_dtype=jnp.float32)             # (B*T, Cp)

    logit = logit2d.reshape(B, T, -1)[:, :, :C1]
    rep = rep_bt[:, :, :Hs]
    return logit, rep


# ============================================================================
# Pure-JAX f32 reference (numerical sanity check in __main__)
# ============================================================================
def _gru_layer_ref(x_tbd, w_ih, w_hh, b_ih, b_hh, reverse=False):
    T = x_tbd.shape[0]
    H = w_hh.shape[1]
    h = jnp.zeros((x_tbd.shape[1], H), jnp.float32)
    outs = [None] * T
    order = range(T - 1, -1, -1) if reverse else range(T)
    for t in order:
        gi = x_tbd[t] @ w_ih.T + b_ih
        gh = h @ w_hh.T + b_hh
        r = jax.nn.sigmoid(gi[:, :H] + gh[:, :H])
        z = jax.nn.sigmoid(gi[:, H:2 * H] + gh[:, H:2 * H])
        n = jnp.tanh(gi[:, 2 * H:] + r * gh[:, 2 * H:])
        h = (1.0 - z) * n + z * h
        outs[t] = h
    return jnp.stack(outs), h


def _tad_reference(params, x):
    B, T, F, Din = x.shape
    h = jnp.transpose(x.reshape(B * T, F, Din), (1, 0, 2))
    h_last = None
    for layer in params["embed_gru"]:
        h, h_last = _gru_layer_ref(h, *layer)
    inp = jnp.transpose(h_last.reshape(B, T, -1), (1, 0, 2))
    hf = hb = None
    for fwd_p, bwd_p in params["seq_gru"]:
        hf, _ = _gru_layer_ref(inp, *fwd_p)
        hb, _ = _gru_layer_ref(inp, *bwd_p, reverse=True)
        inp = jnp.concatenate([hf, hb], axis=-1)
    rep_t = hf + hb
    logit_t = rep_t @ params["fc_w_t"] + params["fc_b"]
    return jnp.transpose(logit_t, (1, 0, 2)), jnp.transpose(rep_t, (1, 0, 2))


if __name__ == "__main__":
    # Small, module-consistent shapes.
    n_classes = 5
    B, T, n_frames, input_size = 2, 8, 4, 16
    hidden_size, n_layers = 32, 1
    hidden_size_seq, n_layers_seq = 32, 1

    key = jax.random.PRNGKey(0)
    pkey, xkey = jax.random.split(key)
    params = init_params(pkey, n_classes, input_size, hidden_size, n_layers,
                         hidden_size_seq, n_layers_seq)
    x = jax.random.normal(xkey, (B, T, n_frames, input_size), jnp.float32)

    packed = pack_params(params, n_classes, hidden_size, hidden_size_seq)
    logit, rep = tad_forward(packed, x)
    jax.block_until_ready((logit, rep))

    assert logit.shape == (B, T, n_classes + 1), logit.shape
    assert rep.shape == (B, T, hidden_size_seq), rep.shape
    assert bool(jnp.all(jnp.isfinite(logit))) and bool(jnp.all(jnp.isfinite(rep)))

    # Numerical sanity check vs. an f32 pure-JAX reference.  The kernels use
    # bf16 MXU operands AND bf16-stored gi / inter-layer activations with f32
    # accumulation and f32 gate math, so allow a loose tolerance.
    logit_ref, rep_ref = _tad_reference(params, x)
    assert float(jnp.max(jnp.abs(logit - logit_ref))) < 1e-1
    assert float(jnp.max(jnp.abs(rep - rep_ref))) < 1e-1

    print("KERNEL_OK")
</pallas_src>

<mosaic_0001>
module attributes {stable_mosaic.version = 11 : i64} {
  func.func @_proj_kernel(%arg0: i32, %arg1: memref<64x16xf32, #tpu.memory_space<vmem>>, %arg2: memref<16x384xbf16, #tpu.memory_space<vmem>>, %arg3: memref<1x384xf32, #tpu.memory_space<vmem>>, %arg4: memref<64x384xbf16, #tpu.memory_space<vmem>>) attributes {dimension_semantics = [#tpu.dimension_semantics<parallel>], iteration_bounds = array<i64: 1>, scalar_prefetch = 0 : i64, scratch_operands = 0 : i64, tpu.core_type = #tpu.core_type<tc>, window_params = [{transform_indices = @transform_0, window_bounds = array<i64: 64, 16>}, {pipeline_mode = #tpu.pipeline_mode<synchronous>, transform_indices = @transform_1, window_bounds = array<i64: 16, 384>}, {pipeline_mode = #tpu.pipeline_mode<synchronous>, transform_indices = @transform_2, window_bounds = array<i64: 1, 384>}, {transform_indices = @transform_3, window_bounds = array<i64: 64, 384>}]} {
    %c0 = arith.constant 0 : index
    %c0_0 = arith.constant 0 : index
    %0 = vector.load %arg1[%c0, %c0_0] : memref<64x16xf32, #tpu.memory_space<vmem>>, vector<64x16xf32>
    %1 = arith.truncf %0 : vector<64x16xf32> to vector<64x16xbf16>
    %c0_1 = arith.constant 0 : index
    %c0_2 = arith.constant 0 : index
    %2 = vector.load %arg2[%c0_1, %c0_2] : memref<16x384xbf16, #tpu.memory_space<vmem>>, vector<16x384xbf16>
    %cst = arith.constant dense<0.000000e+00> : vector<64x384xf32>
    %3 = tpu.matmul %1, %2, %cst {dimension_numbers = #tpu.dot_dimension_numbers<[1], [0], [0], [1], [0, 0, 1, 1], [], []>} : vector<64x16xbf16>, vector<16x384xbf16>, vector<64x384xf32> -> vector<64x384xf32>
    %c0_3 = arith.constant 0 : index
    %c0_4 = arith.constant 0 : index
    %4 = vector.load %arg3[%c0_3, %c0_4] : memref<1x384xf32, #tpu.memory_space<vmem>>, vector<1x384xf32>
    %5 = vector.broadcast %4 : vector<1x384xf32> to vector<64x384xf32>
    %6 = arith.addf %3, %5 : vector<64x384xf32>
    %7 = arith.truncf %6 : vector<64x384xf32> to vector<64x384xbf16>
    %c0_5 = arith.constant 0 : index
    %c0_6 = arith.constant 0 : index
    %8 = vector.load %arg4[%c0_5, %c0_6] : memref<64x384xbf16, #tpu.memory_space<vmem>>, vector<64x384xbf16>
    tpu.vector_store %arg4[%c0_5, %c0_6], %7 {strides = array<i32>} : memref<64x384xbf16, #tpu.memory_space<vmem>>, vector<64x384xbf16>,
    return
  }
  func.func @transform_0(%arg0: i32) -> (i32, i32) {
    %c0_i32 = arith.constant 0 : i32
    %c0_i32_0 = arith.constant 0 : i32
    return %arg0, %c0_i32 : i32, i32
  }
  func.func @transform_1(%arg0: i32) -> (i32, i32) {
    %c0_i32 = arith.constant 0 : i32
    %c0_i32_0 = arith.constant 0 : i32
    %c0_i32_1 = arith.constant 0 : i32
    return %c0_i32, %c0_i32_0 : i32, i32
  }
  func.func @transform_2(%arg0: i32) -> (i32, i32) {
    %c0_i32 = arith.constant 0 : i32
    %c0_i32_0 = arith.constant 0 : i32
    %c0_i32_1 = arith.constant 0 : i32
    return %c0_i32, %c0_i32_0 : i32, i32
  }
  func.func @transform_3(%arg0: i32) -> (i32, i32) {
    %c0_i32 = arith.constant 0 : i32
    %c0_i32_0 = arith.constant 0 : i32
    return %arg0, %c0_i32 : i32, i32
  }
}

</mosaic_0001>

<llo_original>
// kernel: tpu_custom_call.1
$region0: #{tpu_custom_call.1}
  #allocation0 [shape = 'u32[]', space=smem, size = 0x4, offset = 0x4, fixed_abs, tag = 'smem constant byte address 0x4 - core index']
  #allocation1 [shape = 'u32[72,128]{1,0:T(1,128)}', space=vmem, size = 0x9000, scoped, tag = 'internal scratch']
  %s0 = inlined_call_operand.vmem [shape: f32[64,16], index: 0, kind: input, shape index: {}]
  %s1 = inlined_call_operand.vmem [shape: bf16[16,384], index: 1, kind: input, shape index: {}]
  %s2 = inlined_call_operand.vmem [shape: f32[1,384], index: 2, kind: input, shape index: {}]
  %s3 = inlined_call_operand.hbm [shape: bf16[64,384], index: 3, kind: output, shape index: {}]
  %s4 = sld [smem:[#allocation0]]
  $region22: #{tpu_custom_call.1} parent=0
    _
  %s6 = ssub.s32 1, %s4
  %s7 = scalar_select 0, %s6, %s4
  $region1: #{tpu_custom_call.1} parent=0
    #allocation2 [shape = 'u8[49152]{0}', space=vmem, size = 0xc000, scoped, tag = 'output window, operand 0, single buffered']
    #allocation3 [shape = 's32[1]{0}', space=sflag, size = 0x4, scoped, tag = 'scoped memory for tpu_custom_call.1']
    %8 = vsyncpa [#allocation3], 0
    // Predicated region
    $region2: #{tpu_custom_call.1} parent=1 // pred_check
      _
    $region3: #{tpu_custom_call.1} parent=1 // pred_check_branch
      %10 = sbr.rel (0) target = $region5
    $region4: #{tpu_custom_call.1} parent=1 // pred_region
      _
    $region5: #{tpu_custom_call.1} parent=1 // pred_fallthru
      _
    // Predicated region
    $region6: #{tpu_custom_call.1} parent=1 // pred_check
      _
    $region7: #{tpu_custom_call.1} parent=1 // pred_check_branch
      %12 = sbr.rel (0) target = $region9
    $region8: #{tpu_custom_call.1} parent=1 // pred_region
      _
    $region9: #{tpu_custom_call.1} parent=1 // pred_fallthru
      _
    // Predicated region
    $region10: #{tpu_custom_call.1} parent=1 // pred_check
      _
    $region11: #{tpu_custom_call.1} parent=1 // pred_check_branch
      %14 = sbr.rel (0) target = $region13
    $region12: #{tpu_custom_call.1} parent=1 // pred_region
      _
    $region13: #{tpu_custom_call.1} parent=1 // pred_fallthru
      _
    %v16 = vld [vmem:[%s0] sm:$0xff]
    %v17 = vld [vmem:[%s0 + $0x8] sm:$0xff]
    %v18 = vld [vmem:[%s0 + $0x10] sm:$0xff]
    %v19 = vld [vmem:[%s0 + $0x18] sm:$0xff]
    %v20 = vld [vmem:[%s0 + $0x20] sm:$0xff]
    %v21 = vld [vmem:[%s0 + $0x28] sm:$0xff]
    %v22 = vld [vmem:[%s0 + $0x30] sm:$0xff]
    %v23 = vld [vmem:[%s0 + $0x38] sm:$0xff]
    %v24 = vpack.c.bf16 %v17, %v16
    %v25 = vpack.c.bf16 %v19, %v18
    %v26 = vpack.c.bf16 %v21, %v20
    %v27 = vpack.c.bf16 %v23, %v22
    %v28 = vld [vmem:[%s1] sm:$0xff]
    %v29 = vld [vmem:[%s1 + $0x8] sm:$0xf]
    %v30 = vld [vmem:[%s1 + $0xc] sm:$0xff]
    %v31 = vld [vmem:[%s1 + $0x14] sm:$0xf]
    %v32 = vld [vmem:[%s2] sm:$0x7]
    %v34 = vperm.slane %v32, 0
    %v35 = vperm.slane %v32, 1
    %v36 = vperm.slane %v32, 2
    %v44 = vunpack.c.l.b16 %v28
    %v45 = vunpack.c.h.b16 %v28
    %v46 = vunpack.c.l.b16 %v29
    %v47 = vunpack.c.l.b16 %v30
    %v48 = vunpack.c.h.b16 %v30
    %v49 = vunpack.c.l.b16 %v31
    %v50 = vpack.c.b16 %v47, %v44
    %v51 = vpack.c.b16 %v48, %v45
    %v52 = vpack.c.b16 %v49, %v46
    %vm56 = vcmask 130048
    %v58 = vsel %vm56, %v24, 0
    %v61 = vsel %vm56, %v25, 0
    %v64 = vsel %vm56, %v26, 0
    %v67 = vsel %vm56, %v27, 0
    %69 = vmatpush.bf16.msra.mxu0 0
    %70 = vmatpush.bf16.msra.mxu0 0
    %71 = vmatpush.bf16.msra.mxu0 0
    %72 = vmatpush.bf16.msra.mxu0 0
    %73 = vmatpush.bf16.msra.mxu0 0
    %74 = vmatpush.bf16.msra.mxu0 0
    %75 = vmatpush.bf16.msra.mxu0 0
    %76 = vmatpush.bf16.msra.mxu0 %v50
    %77 = vmatmul.bf16.gmra.mxu0 %v58
    %v78 = vpop.f32.mrf.mxu0
    %v79 = vadd.f32 %v34, %v78
    %v80 = vpop.f32.mrf.mxu0
    %v81 = vadd.f32 %v34, %v80
    %82 = vmatmul.bf16.gmra.mxu0 %v61
    %v83 = vpop.f32.mrf.mxu0
    %v84 = vadd.f32 %v34, %v83
    %v85 = vpop.f32.mrf.mxu0
    %v86 = vadd.f32 %v34, %v85
    %87 = vmatmul.bf16.gmra.mxu0 %v64
    %v88 = vpop.f32.mrf.mxu0
    %v89 = vadd.f32 %v34, %v88
    %v90 = vpop.f32.mrf.mxu0
    %v91 = vadd.f32 %v34, %v90
    %92 = vmatmul.bf16.gmra.mxu0 %v67
    %v93 = vpop.f32.mrf.mxu0
    %v94 = vadd.f32 %v34, %v93
    %v95 = vpop.f32.mrf.mxu0
    %v96 = vadd.f32 %v34, %v95
    %97 = vdwg.mxu0
    %98 = vmatpush.bf16.msra.mxu0 0
    %99 = vmatpush.bf16.msra.mxu0 0
    %100 = vmatpush.bf16.msra.mxu0 0
    %101 = vmatpush.bf16.msra.mxu0 0
    %102 = vmatpush.bf16.msra.mxu0 0
    %103 = vmatpush.bf16.msra.mxu0 0
    %104 = vmatpush.bf16.msra.mxu0 0
    %105 = vmatpush.bf16.msra.mxu0 %v51
    %106 = vmatmul.bf16.gmra.mxu0 %v58
    %v107 = vpop.f32.mrf.mxu0
    %v108 = vadd.f32 %v35, %v107
    %v109 = vpop.f32.mrf.mxu0
    %v110 = vadd.f32 %v35, %v109
    %111 = vmatmul.bf16.gmra.mxu0 %v61
    %v112 = vpop.f32.mrf.mxu0
    %v113 = vadd.f32 %v35, %v112
    %v114 = vpop.f32.mrf.mxu0
    %v115 = vadd.f32 %v35, %v114
    %116 = vmatmul.bf16.gmra.mxu0 %v64
    %v117 = vpop.f32.mrf.mxu0
    %v118 = vadd.f32 %v35, %v117
    %v119 = vpop.f32.mrf.mxu0
    %v120 = vadd.f32 %v35, %v119
    %121 = vmatmul.bf16.gmra.mxu0 %v67
    %v122 = vpop.f32.mrf.mxu0
    %v123 = vadd.f32 %v35, %v122
    %v124 = vpop.f32.mrf.mxu0
    %v125 = vadd.f32 %v35, %v124
    %126 = vdwg.mxu0
    %127 = vmatpush.bf16.msra.mxu0 0
    %128 = vmatpush.bf16.msra.mxu0 0
    %129 = vmatpush.bf16.msra.mxu0 0
    %130 = vmatpush.bf16.msra.mxu0 0
    %131 = vmatpush.bf16.msra.mxu0 0
    %132 = vmatpush.bf16.msra.mxu0 0
    %133 = vmatpush.bf16.msra.mxu0 0
    %134 = vmatpush.bf16.msra.mxu0 %v52
    %135 = vmatmul.bf16.gmra.mxu0 %v58
    %v136 = vpop.f32.mrf.mxu0
    %v137 = vadd.f32 %v36, %v136
    %v138 = vpop.f32.mrf.mxu0
    %v139 = vadd.f32 %v36, %v138
    %140 = vmatmul.bf16.gmra.mxu0 %v61
    %v141 = vpop.f32.mrf.mxu0
    %v142 = vadd.f32 %v36, %v141
    %v143 = vpop.f32.mrf.mxu0
    %v144 = vadd.f32 %v36, %v143
    %145 = vmatmul.bf16.gmra.mxu0 %v64
    %v146 = vpop.f32.mrf.mxu0
    %v147 = vadd.f32 %v36, %v146
    %v148 = vpop.f32.mrf.mxu0
    %v149 = vadd.f32 %v36, %v148
    %150 = vmatmul.bf16.gmra.mxu0 %v67
    %v151 = vpop.f32.mrf.mxu0
    %v152 = vadd.f32 %v36, %v151
    %v153 = vpop.f32.mrf.mxu0
    %v154 = vadd.f32 %v36, %v153
    %155 = vdwg.mxu0
    %v156 = vpack.c.bf16 %v108, %v79
    %v157 = vpack.c.bf16 %v137, %v137
    %v158 = vpack.c.bf16 %v110, %v81
    %v159 = vpack.c.bf16 %v139, %v139
    %v160 = vpack.c.bf16 %v113, %v84
    %v161 = vpack.c.bf16 %v142, %v142
    %v162 = vpack.c.bf16 %v115, %v86
    %v163 = vpack.c.bf16 %v144, %v144
    %v164 = vpack.c.bf16 %v118, %v89
    %v165 = vpack.c.bf16 %v147, %v147
    %v166 = vpack.c.bf16 %v120, %v91
    %v167 = vpack.c.bf16 %v149, %v149
    %v168 = vpack.c.bf16 %v123, %v94
    %v169 = vpack.c.bf16 %v152, %v152
    %v170 = vpack.c.bf16 %v125, %v96
    %v171 = vpack.c.bf16 %v154, %v154
    %172 = vst [vmem:[#allocation2] sm:$0xff] %v156
    %173 = vst [vmem:[#allocation2 + $0x8] sm:$0xf] %v157
    %174 = vst [vmem:[#allocation2 + $0xc] sm:$0xff] %v158
    %175 = vst [vmem:[#allocation2 + $0x14] sm:$0xf] %v159
    %176 = vst [vmem:[#allocation2 + $0x18] sm:$0xff] %v160
    %177 = vst [vmem:[#allocation2 + $0x20] sm:$0xf] %v161
    %178 = vst [vmem:[#allocation2 + $0x24] sm:$0xff] %v162
    %179 = vst [vmem:[#allocation2 + $0x2c] sm:$0xf] %v163
    %180 = vst [vmem:[#allocation2 + $0x30] sm:$0xff] %v164
    %181 = vst [vmem:[#allocation2 + $0x38] sm:$0xf] %v165
    %182 = vst [vmem:[#allocation2 + $0x3c] sm:$0xff] %v166
    %183 = vst [vmem:[#allocation2 + $0x44] sm:$0xf] %v167
    %184 = vst [vmem:[#allocation2 + $0x48] sm:$0xff] %v168
    %185 = vst [vmem:[#allocation2 + $0x50] sm:$0xf] %v169
    %186 = vst [vmem:[#allocation2 + $0x54] sm:$0xff] %v170
    %187 = vst [vmem:[#allocation2 + $0x5c] sm:$0xf] %v171
    // Predicated region
    $region14: #{tpu_custom_call.1} parent=1 // pred_check
      _
    $region15: #{tpu_custom_call.1} parent=1 // pred_check_branch
      %189 = sbr.rel (0) target = $region17
    $region16: #{tpu_custom_call.1} parent=1 // pred_region
      %191 = vsyncadd [#allocation3], 0
      %s192 = sshll.u32 [#allocation2], 4
      %s193 = int_to_ptr.vmem [resolvable:$true] %s192
      %s194 = sshll.u32 %s3, 4
      %s195 = int_to_ptr.hbm [resolvable:$true] %s194
      %200 = dma.vmem_to_hbm [thread:$0]  %s193, 1536, %s195, [#allocation3], 192, 192, 12
    $region17: #{tpu_custom_call.1} parent=1 // pred_fallthru
      _
    // Predicated region
    $region18: #{tpu_custom_call.1} parent=1 // pred_check
      _
    $region19: #{tpu_custom_call.1} parent=1 // pred_check_branch
      %202 = sbr.rel (0) target = $region21
    $region20: #{tpu_custom_call.1} parent=1 // pred_region
      %204 = dma.done [#allocation3], 1536
    $region21: #{tpu_custom_call.1} parent=1 // pred_fallthru
      _
    %205 = vsyncpa [#allocation3], 1

</llo_original>
